<compile_context>
chip_gen: v5e
topology: v5e:2x2
jax: 0.10.0
libtpu: 0.0.40
codegen_flags: <defaults>
</compile_context>

<pallas_src>
import math

import jax
import jax.numpy as jnp
from jax import lax
from jax.experimental import pallas as pl
from jax.experimental.pallas import tpu as pltpu


def _round_up(x, m):
    return ((x + m - 1) // m) * m


# -----------------------------------------------------------------------------
# Kernel 1: shared key / value projections, computed once per forward call.
#   src/val : (S, d_llm), wk/wv : (d_llm, H*E), bk/bv : (1, H*E)
#   Outputs k_full, v_full : (S, H*E) (split into per-head slabs in the wrapper).
# -----------------------------------------------------------------------------
def _make_kv_kernel(mxu_dtype):
    def kv_kernel(src_ref, val_ref, wk_ref, bk_ref, wv_ref, bv_ref, k_ref, v_ref):
        src = src_ref[...].astype(mxu_dtype)   # (S, d_llm)
        val = val_ref[...].astype(mxu_dtype)   # (S, d_llm)
        k_ref[...] = (jnp.dot(src, wk_ref[...].astype(mxu_dtype),
                              preferred_element_type=jnp.float32)
                      + bk_ref[...]).astype(k_ref.dtype)
        v_ref[...] = (jnp.dot(val, wv_ref[...].astype(mxu_dtype),
                              preferred_element_type=jnp.float32)
                      + bv_ref[...]).astype(v_ref.dtype)
    return kv_kernel


# -----------------------------------------------------------------------------
# Kernel 2: per-row-tile attention + output projection.
#   tgt_ref : (TM, d_model) row tile of the flattened (B*L) queries
#   kh/vh   : (H, S, E) shared heads (grid-invariant, resident in VMEM)
#   wq_ref  : (H, d_model, E)  (1/sqrt(E) pre-folded), bq_ref : (H, 1, E)
#   wo_ref  : (H, E, d_llm_pad), bo_ref : (1, d_llm_pad)
#   out_ref : (TM, d_llm_pad)   (lane-dense; padding sliced off in wrapper)
# -----------------------------------------------------------------------------
def _make_attn_kernel(H, mxu_dtype):
    def attn_kernel(tgt_ref, kh_ref, vh_ref, wq_ref, bq_ref, wo_ref, bo_ref, out_ref):
        tgt = tgt_ref[...].astype(mxu_dtype)                       # (TM, d_model)
        acc = None
        for h in range(H):                                         # static unroll; no lane slicing
            # Query projection for head h (scale already folded into Wq/bq).
            q_h = jnp.dot(tgt, wq_ref[h].astype(mxu_dtype),
                          preferred_element_type=jnp.float32) + bq_ref[h]      # (TM, E)
            # scores = q_h @ k_h^T  (contract E on both operands, no explicit transpose)
            scores = lax.dot_general(
                q_h.astype(mxu_dtype), kh_ref[h].astype(mxu_dtype),
                (((1,), (1,)), ((), ())),
                preferred_element_type=jnp.float32)                             # (TM, S)
            # Numerically stable softmax over S, kept in f32 (v5e-safe).
            m = jnp.max(scores, axis=-1, keepdims=True)
            p = jnp.exp(scores - m)
            denom = jnp.sum(p, axis=-1, keepdims=True)
            a = p * pl.reciprocal(denom, approx=True)
            # dropout(p=0.1) is identity at inference time.
            o_h = jnp.dot(a.astype(mxu_dtype), vh_ref[h].astype(mxu_dtype),
                          preferred_element_type=jnp.float32)                   # (TM, E)
            # Output projection folded per head:  concat_h(o_h) @ Wo == sum_h o_h @ Wo_h
            contrib = jnp.dot(o_h.astype(mxu_dtype), wo_ref[h].astype(mxu_dtype),
                              preferred_element_type=jnp.float32)               # (TM, d_llm_pad)
            acc = contrib if acc is None else acc + contrib
        out_ref[...] = (acc + bo_ref[...]).astype(out_ref.dtype)
    return attn_kernel


def state_abstraction_forward(target, source, value, params, *, mxu_dtype=jnp.float32):
    """Pallas implementation of StateAbstractionLayer.forward (eval mode).

    Set mxu_dtype=jnp.bfloat16 on v6e/v7x for higher MXU throughput; softmax and
    accumulation stay in f32 regardless.
    """
    B, L, d_model = target.shape
    S, d_llm = source.shape
    H = params["n_heads"]
    wq, bq = params["wq"], params["bq"]
    wk, bk = params["wk"], params["bk"]
    wv, bv = params["wv"], params["bv"]
    wo, bo = params["wo"], params["bo"]
    HE = wq.shape[1]
    E = HE // H
    scale = 1.0 / math.sqrt(E)
    f32 = jnp.float32

    # ---- wrapper-side layout plumbing (weights only; one-time, tiny) ----
    wq_h = (wq.reshape(d_model, H, E).transpose(1, 0, 2) * scale).astype(f32)  # (H, d_model, E)
    bq_h = (bq.reshape(1, H, E).transpose(1, 0, 2) * scale).astype(f32)        # (H, 1, E)

    # Lane-dense output: pad d_llm to a multiple of 128 (zero columns, sliced later).
    d_llm_pad = _round_up(d_llm, 128)
    wo_h = jnp.pad(wo.reshape(H, E, d_llm).astype(f32),
                   ((0, 0), (0, 0), (0, d_llm_pad - d_llm)))                   # (H, E, d_llm_pad)
    bo_p = jnp.pad(bo.astype(f32), ((0, 0), (0, d_llm_pad - d_llm)))           # (1, d_llm_pad)

    # ---- 1) shared K/V projections: exactly one invocation, full-width matmuls ----
    k_full, v_full = pl.pallas_call(
        _make_kv_kernel(mxu_dtype),
        out_shape=(jax.ShapeDtypeStruct((S, HE), f32),
                   jax.ShapeDtypeStruct((S, HE), f32)),
    )(source.astype(f32), value.astype(f32),
      wk.astype(f32), bk.astype(f32), wv.astype(f32), bv.astype(f32))

    # Split into per-head slabs (tiny, batch-independent layout plumbing).
    k_heads = k_full.reshape(S, H, E).transpose(1, 0, 2)                       # (H, S, E)
    v_heads = v_full.reshape(S, H, E).transpose(1, 0, 2)                       # (H, S, E)

    # ---- 2) attention + output projection over flattened (B*L) rows ----
    R = B * L
    TM = min(256, _round_up(R, 8))                 # sublane-aligned row tile
    R_pad = _round_up(R, TM)
    n_tiles = R_pad // TM

    tgt_flat = target.reshape(R, d_model).astype(f32)
    if R_pad != R:
        tgt_flat = jnp.pad(tgt_flat, ((0, R_pad - R), (0, 0)))

    flops = (2 * S * d_llm * HE * 2          # K/V projections
             + 2 * R_pad * d_model * HE      # Q projection
             + 2 * H * R_pad * S * E * 2     # scores + A@V
             + 2 * R_pad * HE * d_llm_pad)   # output projection
    bytes_accessed = 4 * (R_pad * (d_model + d_llm_pad) + 2 * S * d_llm
                          + 2 * H * S * E + d_model * HE + 2 * d_llm * HE
                          + HE * d_llm_pad)
    cost = pl.CostEstimate(flops=flops, transcendentals=H * R_pad * S,
                           bytes_accessed=bytes_accessed)

    inv2 = lambda i: (0, 0)      # grid-invariant 2-D operands
    inv3 = lambda i: (0, 0, 0)   # grid-invariant 3-D operands
    out_pad = pl.pallas_call(
        _make_attn_kernel(H, mxu_dtype),
        out_shape=jax.ShapeDtypeStruct((R_pad, d_llm_pad), f32),
        grid=(n_tiles,),
        in_specs=[
            pl.BlockSpec((TM, d_model), lambda i: (i, 0)),   # query rows (per tile)
            pl.BlockSpec((H, S, E), inv3),                   # K heads (shared)
            pl.BlockSpec((H, S, E), inv3),                   # V heads (shared)
            pl.BlockSpec((H, d_model, E), inv3),             # Wq (pre-scaled, per-head slabs)
            pl.BlockSpec((H, 1, E), inv3),                   # bq (pre-scaled)
            pl.BlockSpec((H, E, d_llm_pad), inv3),           # Wo (per-head slabs, padded)
            pl.BlockSpec((1, d_llm_pad), inv2),              # bo (padded)
        ],
        out_specs=pl.BlockSpec((TM, d_llm_pad), lambda i: (i, 0)),
        compiler_params=pltpu.CompilerParams(
            dimension_semantics=("parallel",),               # rows shard across TCs (v7x megacore)
            vmem_limit_bytes=32 * 1024 * 1024),
        cost_estimate=cost,
    )(tgt_flat, k_heads, v_heads, wq_h, bq_h, wo_h, bo_p)

    return out_pad[:R, :d_llm].reshape(B, L, d_llm)


def reference_forward(target, source, value, params):
    """Pure-JAX reference replicating the PyTorch forward (dropout = identity)."""
    B, L, _ = target.shape
    S, _ = source.shape
    H = params["n_heads"]
    q = target @ params["wq"] + params["bq"][0]
    k = source @ params["wk"] + params["bk"][0]
    v = value @ params["wv"] + params["bv"][0]
    E = q.shape[-1] // H
    q = q.reshape(B, L, H, E)
    k = k.reshape(S, H, E)
    v = v.reshape(S, H, E)
    scale = 1.0 / math.sqrt(E)
    scores = jnp.einsum('blhe,she->bhls', q, k)
    A = jax.nn.softmax(scale * scores, axis=-1)
    out = jnp.einsum('bhls,she->blhe', A, v).reshape(B, L, H * E)
    return out @ params["wo"] + params["bo"][0]


if __name__ == "__main__":
    B, L, S = 2, 8, 16
    d_model, n_heads = 32, 4
    d_keys = d_model // n_heads           # PyTorch default d_keys
    d_llm = 64
    HE = d_keys * n_heads

    key = jax.random.PRNGKey(0)
    ks = jax.random.split(key, 12)

    def init(k, shape, scale=0.1):
        return (scale * jax.random.normal(k, shape)).astype(jnp.float32)

    params = {
        "n_heads": n_heads,
        "wq": init(ks[0], (d_model, HE)), "bq": init(ks[1], (1, HE)),
        "wk": init(ks[2], (d_llm, HE)),   "bk": init(ks[3], (1, HE)),
        "wv": init(ks[4], (d_llm, HE)),   "bv": init(ks[5], (1, HE)),
        "wo": init(ks[6], (HE, d_llm)),   "bo": init(ks[7], (1, d_llm)),
    }

    target = init(ks[8], (B, L, d_model), scale=1.0)
    source = init(ks[9], (S, d_llm), scale=1.0)
    value = init(ks[10], (S, d_llm), scale=1.0)

    out = state_abstraction_forward(target, source, value, params)
    out = jax.block_until_ready(out)

    ref = reference_forward(target, source, value, params)
    assert out.shape == (B, L, d_llm)
    # Tolerance accounts for pl.reciprocal(approx=True) in the softmax denominator
    # (hardware reciprocal estimate, ~2^-12 relative error).
    assert jnp.allclose(out, ref, atol=2e-3, rtol=2e-3), \
        f"max abs err = {jnp.max(jnp.abs(out - ref))}"

    # TODO(synk): nn.Dropout(attention_dropout) is intentionally omitted (inference/eval mode).
    print("KERNEL_OK")
</pallas_src>

<mosaic_0001>
module attributes {stable_mosaic.version = 11 : i64} {
  func.func @kv_kernel(%arg0: memref<16x64xf32, #tpu.memory_space<vmem>>, %arg1: memref<16x64xf32, #tpu.memory_space<vmem>>, %arg2: memref<64x32xf32, #tpu.memory_space<vmem>>, %arg3: memref<1x32xf32, #tpu.memory_space<vmem>>, %arg4: memref<64x32xf32, #tpu.memory_space<vmem>>, %arg5: memref<1x32xf32, #tpu.memory_space<vmem>>, %arg6: memref<16x32xf32, #tpu.memory_space<vmem>>, %arg7: memref<16x32xf32, #tpu.memory_space<vmem>>) attributes {dimension_semantics = [], scalar_prefetch = 0 : i64, scratch_operands = 0 : i64, tpu.core_type = #tpu.core_type<tc>} {
    %c0 = arith.constant 0 : index
    %c0_0 = arith.constant 0 : index
    %0 = vector.load %arg0[%c0, %c0_0] : memref<16x64xf32, #tpu.memory_space<vmem>>, vector<16x64xf32>
    %c0_1 = arith.constant 0 : index
    %c0_2 = arith.constant 0 : index
    %1 = vector.load %arg1[%c0_1, %c0_2] : memref<16x64xf32, #tpu.memory_space<vmem>>, vector<16x64xf32>
    %c0_3 = arith.constant 0 : index
    %c0_4 = arith.constant 0 : index
    %2 = vector.load %arg2[%c0_3, %c0_4] : memref<64x32xf32, #tpu.memory_space<vmem>>, vector<64x32xf32>
    %cst = arith.constant dense<0.000000e+00> : vector<16x32xf32>
    %3 = tpu.matmul %0, %2, %cst {dimension_numbers = #tpu.dot_dimension_numbers<[1], [0], [0], [1], [0, 0, 1, 1], [], []>} : vector<16x64xf32>, vector<64x32xf32>, vector<16x32xf32> -> vector<16x32xf32>
    %c0_5 = arith.constant 0 : index
    %c0_6 = arith.constant 0 : index
    %4 = vector.load %arg3[%c0_5, %c0_6] : memref<1x32xf32, #tpu.memory_space<vmem>>, vector<1x32xf32>
    %5 = vector.broadcast %4 : vector<1x32xf32> to vector<16x32xf32>
    %6 = arith.addf %3, %5 : vector<16x32xf32>
    %c0_7 = arith.constant 0 : index
    %c0_8 = arith.constant 0 : index
    %7 = vector.load %arg6[%c0_7, %c0_8] : memref<16x32xf32, #tpu.memory_space<vmem>>, vector<16x32xf32>
    tpu.vector_store %arg6[%c0_7, %c0_8], %6 {strides = array<i32>} : memref<16x32xf32, #tpu.memory_space<vmem>>, vector<16x32xf32>,
    %c0_9 = arith.constant 0 : index
    %c0_10 = arith.constant 0 : index
    %8 = vector.load %arg4[%c0_9, %c0_10] : memref<64x32xf32, #tpu.memory_space<vmem>>, vector<64x32xf32>
    %cst_11 = arith.constant dense<0.000000e+00> : vector<16x32xf32>
    %9 = tpu.matmul %1, %8, %cst_11 {dimension_numbers = #tpu.dot_dimension_numbers<[1], [0], [0], [1], [0, 0, 1, 1], [], []>} : vector<16x64xf32>, vector<64x32xf32>, vector<16x32xf32> -> vector<16x32xf32>
    %c0_12 = arith.constant 0 : index
    %c0_13 = arith.constant 0 : index
    %10 = vector.load %arg5[%c0_12, %c0_13] : memref<1x32xf32, #tpu.memory_space<vmem>>, vector<1x32xf32>
    %11 = vector.broadcast %10 : vector<1x32xf32> to vector<16x32xf32>
    %12 = arith.addf %9, %11 : vector<16x32xf32>
    %c0_14 = arith.constant 0 : index
    %c0_15 = arith.constant 0 : index
    %13 = vector.load %arg7[%c0_14, %c0_15] : memref<16x32xf32, #tpu.memory_space<vmem>>, vector<16x32xf32>
    tpu.vector_store %arg7[%c0_14, %c0_15], %12 {strides = array<i32>} : memref<16x32xf32, #tpu.memory_space<vmem>>, vector<16x32xf32>,
    return
  }
}

</mosaic_0001>

<llo_original>
// kernel: tpu_custom_call.1
$region0: #{tpu_custom_call.1}
  #allocation0 [shape = 'u32[]', space=smem, size = 0x4, offset = 0x4, fixed_abs, tag = 'smem constant byte address 0x4 - core index']
  #allocation1 [shape = 'u32[72,128]{1,0:T(1,128)}', space=vmem, size = 0x9000, scoped, tag = 'internal scratch']
  %s0 = inlined_call_operand.vmem [shape: f32[16,64], index: 0, kind: input, shape index: {}]
  %s1 = inlined_call_operand.vmem [shape: f32[16,64], index: 1, kind: input, shape index: {}]
  %s2 = inlined_call_operand.vmem [shape: f32[64,32], index: 2, kind: input, shape index: {}]
  %s3 = inlined_call_operand.vmem [shape: f32[1,32], index: 3, kind: input, shape index: {}]
  %s4 = inlined_call_operand.vmem [shape: f32[64,32], index: 4, kind: input, shape index: {}]
  %s5 = inlined_call_operand.vmem [shape: f32[1,32], index: 5, kind: input, shape index: {}]
  %s6 = inlined_call_operand.hbm [shape: f32[16,32], index: 6, kind: output, shape index: {0}]
  %s7 = inlined_call_operand.hbm [shape: f32[16,32], index: 7, kind: output, shape index: {1}]
  %8 = xla_tuple %s6, %s7
  %s9 = sld [smem:[#allocation0]]
  $region42: #{tpu_custom_call.1} parent=0
    _
  %s11 = ssub.s32 1, %s9
  %s12 = scalar_select 0, %s11, %s9
  $region1: #{tpu_custom_call.1} parent=0
    #allocation2 [shape = 'u8[8192]{0}', space=vmem, size = 0x2000, scoped, tag = 'output window, operand 0, single buffered']
    #allocation3 [shape = 's32[1]{0}', space=sflag, size = 0x4, scoped, tag = 'scoped memory for tpu_custom_call.1']
    #allocation4 [shape = 'u8[8192]{0}', space=vmem, size = 0x2000, scoped, tag = 'output window, operand 1, single buffered']
    #allocation5 [shape = 's32[1]{0}', space=sflag, size = 0x4, scoped, tag = 'scoped memory for tpu_custom_call.1']
    %13 = vsyncpa [#allocation3], 0
    %14 = vsyncpa [#allocation5], 0
    // Predicated region
    $region2: #{tpu_custom_call.1} parent=1 // pred_check
      _
    $region3: #{tpu_custom_call.1} parent=1 // pred_check_branch
      %16 = sbr.rel (0) target = $region5
    $region4: #{tpu_custom_call.1} parent=1 // pred_region
      _
    $region5: #{tpu_custom_call.1} parent=1 // pred_fallthru
      _
    // Predicated region
    $region6: #{tpu_custom_call.1} parent=1 // pred_check
      _
    $region7: #{tpu_custom_call.1} parent=1 // pred_check_branch
      %18 = sbr.rel (0) target = $region9
    $region8: #{tpu_custom_call.1} parent=1 // pred_region
      _
    $region9: #{tpu_custom_call.1} parent=1 // pred_fallthru
      _
    // Predicated region
    $region10: #{tpu_custom_call.1} parent=1 // pred_check
      _
    $region11: #{tpu_custom_call.1} parent=1 // pred_check_branch
      %20 = sbr.rel (0) target = $region13
    $region12: #{tpu_custom_call.1} parent=1 // pred_region
      _
    $region13: #{tpu_custom_call.1} parent=1 // pred_fallthru
      _
    // Predicated region
    $region14: #{tpu_custom_call.1} parent=1 // pred_check
      _
    $region15: #{tpu_custom_call.1} parent=1 // pred_check_branch
      %22 = sbr.rel (0) target = $region17
    $region16: #{tpu_custom_call.1} parent=1 // pred_region
      _
    $region17: #{tpu_custom_call.1} parent=1 // pred_fallthru
      _
    // Predicated region
    $region18: #{tpu_custom_call.1} parent=1 // pred_check
      _
    $region19: #{tpu_custom_call.1} parent=1 // pred_check_branch
      %24 = sbr.rel (0) target = $region21
    $region20: #{tpu_custom_call.1} parent=1 // pred_region
      _
    $region21: #{tpu_custom_call.1} parent=1 // pred_fallthru
      _
    // Predicated region
    $region22: #{tpu_custom_call.1} parent=1 // pred_check
      _
    $region23: #{tpu_custom_call.1} parent=1 // pred_check_branch
      %26 = sbr.rel (0) target = $region25
    $region24: #{tpu_custom_call.1} parent=1 // pred_region
      _
    $region25: #{tpu_custom_call.1} parent=1 // pred_fallthru
      _
    %v27 = vld [vmem:[%s0] sm:$0xff]
    %v28 = vld [vmem:[%s0 + $0x8] sm:$0xff]
    %v29 = vld [vmem:[%s1] sm:$0xff]
    %v30 = vld [vmem:[%s1 + $0x8] sm:$0xff]
    %v31 = vld [vmem:[%s2] sm:$0xff]
    %v32 = vld [vmem:[%s2 + $0x8] sm:$0xff]
    %v33 = vld [vmem:[%s2 + $0x10] sm:$0xff]
    %v34 = vld [vmem:[%s2 + $0x18] sm:$0xff]
    %v35 = vld [vmem:[%s2 + $0x20] sm:$0xff]
    %v36 = vld [vmem:[%s2 + $0x28] sm:$0xff]
    %v37 = vld [vmem:[%s2 + $0x30] sm:$0xff]
    %v38 = vld [vmem:[%s2 + $0x38] sm:$0xff]
    %v39 = vld [vmem:[%s3] sm:$0x1]
    %v41 = vperm.slane %v39, 0
    %vm43 = vcmask 523264
    %v45 = vsel %vm43, %v27, 0
    %v48 = vsel %vm43, %v28, 0
    %50 = vmatpush.msra.mxu0 0.0
    %51 = vmatpush.msra.mxu0 0.0
    %52 = vmatpush.msra.mxu0 0.0
    %53 = vmatpush.msra.mxu0 0.0
    %54 = vmatpush.msra.mxu0 0.0
    %55 = vmatpush.msra.mxu0 0.0
    %56 = vmatpush.msra.mxu0 0.0
    %57 = vmatpush.msra.mxu0 0.0
    %58 = vmatpush.msra.mxu0 %v38
    %59 = vmatpush.msra.mxu0 %v37
    %60 = vmatpush.msra.mxu0 %v36
    %61 = vmatpush.msra.mxu0 %v35
    %62 = vmatpush.msra.mxu0 %v34
    %63 = vmatpush.msra.mxu0 %v33
    %64 = vmatpush.msra.mxu0 %v32
    %65 = vmatpush.msra.mxu0 %v31
    %66 = vmatmul.f32.gmra.mxu0 %v45
    %v67 = vpop.f32.mrf.mxu0
    %v68 = vadd.f32 %v41, %v67
    %69 = vmatmul.f32.gmra.mxu0 %v48
    %v70 = vpop.f32.mrf.mxu0
    %v71 = vadd.f32 %v41, %v70
    %72 = vdwg.mxu0
    %vm73 = vcmask 261120
    %74 = vst.msk [vmem:[#allocation2] sm:$0xff] %vm73, %v68
    %75 = vst.msk [vmem:[#allocation2 + $0x8] sm:$0xff] %vm73, %v71
    %v76 = vld [vmem:[%s4] sm:$0xff]
    %v77 = vld [vmem:[%s4 + $0x8] sm:$0xff]
    %v78 = vld [vmem:[%s4 + $0x10] sm:$0xff]
    %v79 = vld [vmem:[%s4 + $0x18] sm:$0xff]
    %v80 = vld [vmem:[%s4 + $0x20] sm:$0xff]
    %v81 = vld [vmem:[%s4 + $0x28] sm:$0xff]
    %v82 = vld [vmem:[%s4 + $0x30] sm:$0xff]
    %v83 = vld [vmem:[%s4 + $0x38] sm:$0xff]
    %v84 = vld [vmem:[%s5] sm:$0x1]
    %v86 = vperm.slane %v84, 0
    %v89 = vsel %vm43, %v29, 0
    %v92 = vsel %vm43, %v30, 0
    %94 = vmatpush.msra.mxu0 0.0
    %95 = vmatpush.msra.mxu0 0.0
    %96 = vmatpush.msra.mxu0 0.0
    %97 = vmatpush.msra.mxu0 0.0
    %98 = vmatpush.msra.mxu0 0.0
    %99 = vmatpush.msra.mxu0 0.0
    %100 = vmatpush.msra.mxu0 0.0
    %101 = vmatpush.msra.mxu0 0.0
    %102 = vmatpush.msra.mxu0 %v83
    %103 = vmatpush.msra.mxu0 %v82
    %104 = vmatpush.msra.mxu0 %v81
    %105 = vmatpush.msra.mxu0 %v80
    %106 = vmatpush.msra.mxu0 %v79
    %107 = vmatpush.msra.mxu0 %v78
    %108 = vmatpush.msra.mxu0 %v77
    %109 = vmatpush.msra.mxu0 %v76
    %110 = vmatmul.f32.gmra.mxu0 %v89
    %v111 = vpop.f32.mrf.mxu0
    %v112 = vadd.f32 %v86, %v111
    %113 = vmatmul.f32.gmra.mxu0 %v92
    %v114 = vpop.f32.mrf.mxu0
    %v115 = vadd.f32 %v86, %v114
    %116 = vdwg.mxu0
    %117 = vst.msk [vmem:[#allocation4] sm:$0xff] %vm73, %v112
    %118 = vst.msk [vmem:[#allocation4 + $0x8] sm:$0xff] %vm73, %v115
    // Predicated region
    $region26: #{tpu_custom_call.1} parent=1 // pred_check
      _
    $region27: #{tpu_custom_call.1} parent=1 // pred_check_branch
      %120 = sbr.rel (0) target = $region29
    $region28: #{tpu_custom_call.1} parent=1 // pred_region
      %122 = vsyncadd [#allocation3], 0
      %s123 = sshll.u32 [#allocation2], 4
      %s124 = int_to_ptr.vmem [resolvable:$true] %s123
      %s125 = sshll.u32 %s6, 4
      %s126 = int_to_ptr.hbm [resolvable:$true] %s125
      %131 = dma.vmem_to_hbm [thread:$0]  %s124, 256, %s126, [#allocation3], 128, 128, 8
    $region29: #{tpu_custom_call.1} parent=1 // pred_fallthru
      _
    // Predicated region
    $region30: #{tpu_custom_call.1} parent=1 // pred_check
      _
    $region31: #{tpu_custom_call.1} parent=1 // pred_check_branch
      %133 = sbr.rel (0) target = $region33
    $region32: #{tpu_custom_call.1} parent=1 // pred_region
      %135 = vsyncadd [#allocation5], 0
      %s136 = sshll.u32 [#allocation4], 4
      %s137 = int_to_ptr.vmem [resolvable:$true] %s136
      %s138 = sshll.u32 %s7, 4
      %s139 = int_to_ptr.hbm [resolvable:$true] %s138
      %144 = dma.vmem_to_hbm [thread:$0]  %s137, 256, %s139, [#allocation5], 128, 128, 8
    $region33: #{tpu_custom_call.1} parent=1 // pred_fallthru
      _
    // Predicated region
    $region34: #{tpu_custom_call.1} parent=1 // pred_check
      _
    $region35: #{tpu_custom_call.1} parent=1 // pred_check_branch
      %146 = sbr.rel (0) target = $region37
    $region36: #{tpu_custom_call.1} parent=1 // pred_region
      %148 = dma.done [#allocation3], 256
    $region37: #{tpu_custom_call.1} parent=1 // pred_fallthru
      _
    // Predicated region
    $region38: #{tpu_custom_call.1} parent=1 // pred_check
      _
    $region39: #{tpu_custom_call.1} parent=1 // pred_check_branch
      %150 = sbr.rel (0) target = $region41
    $region40: #{tpu_custom_call.1} parent=1 // pred_region
      %152 = dma.done [#allocation5], 256
    $region41: #{tpu_custom_call.1} parent=1 // pred_fallthru
      _
    %153 = vsyncpa [#allocation3], 1
    %154 = vsyncpa [#allocation5], 1

</llo_original>
